<compile_context>
chip_gen: v7x
topology: tpu7x:2x2x1
jax: 0.10.0
libtpu: 0.0.40
codegen_flags: <defaults>
</compile_context>

<pallas_src>
import jax
import jax.numpy as jnp
from jax import lax
from jax.experimental import pallas as pl
from jax.experimental.pallas import tpu as pltpu


_LANES = 128
_SUBLANES = 8
_VMEM_TILE_BUDGET_BYTES = 16 * 1024 * 1024   # est. footprint of one pipelined tile
_VMEM_LIMIT_BYTES = 32 * 1024 * 1024         # scoped VMEM limit, safe on v5e/v6e/v7x
_SINGLE_BLOCK_BYTES = 2 * 1024 * 1024        # below this footprint: one untiled block


# ----------------------------------------------------------------------------
# Kernels
# ----------------------------------------------------------------------------
def _sigmoid_kernel(x_ref, o_ref):
    x = x_ref[...].astype(jnp.float32)
    # sigmoid(x) = 0.5*(1 + tanh(x/2)): a single EUP push per element
    # (vs. exp(-x) followed by reciprocal = two pushes; matters on v5e).
    o_ref[...] = (0.5 * (jnp.tanh(0.5 * x) + 1.0)).astype(o_ref.dtype)


def _softmax_rows_kernel(x_ref, o_ref):
    # Generic path: softmax over the last (lane) axis of a (TB, C) tile.
    x = x_ref[...].astype(jnp.float32)
    m = jnp.max(x, axis=-1, keepdims=True)             # XLU lane reduce
    e = jnp.exp(x - m)                                  # EUP
    d = jnp.sum(e, axis=-1, keepdims=True)              # XLU lane reduce
    o_ref[...] = (e * pl.reciprocal(d, approx=True)).astype(o_ref.dtype)


def _make_group_softmax_kernel(c: int):
    """Lane-dense softmax: the tile is (TB, 128) and every 128-lane row holds
    128//c independent softmax groups of c consecutive logits."""
    assert c >= 1 and _LANES % c == 0 and (c & (c - 1)) == 0
    log2c = c.bit_length() - 1

    def kernel(x_ref, o_ref):
        x = x_ref[...].astype(jnp.float32)

        # Per-lane group id (one vreg row).  It is rolled with exactly the same
        # shifts as the data, so the "same group" mask is correct regardless of
        # the hardware rotate direction convention.
        lane = lax.broadcasted_iota(jnp.int32, (1, _LANES), 1)
        gid = lane >> log2c

        # In-group max via a widening +/- (1, 2, ..., c/2) lane-roll window
        # (XLU); masking keeps neighbouring batch rows from contaminating.
        m = x
        for k in range(log2c):
            s = 1 << k
            for shift in (s, _LANES - s):
                nbr = pltpu.roll(m, shift=shift, axis=1)
                nbr_gid = pltpu.roll(gid, shift=shift, axis=1)
                in_group = nbr_gid == gid                # (1,128) -> row bcast
                m = jnp.maximum(m, jnp.where(in_group, nbr, -jnp.inf))

        e = jnp.exp(x - m)                               # EUP, values <= 1

        # In-group sum on the otherwise-idle MXU: block-diagonal ones matrix.
        r = lax.broadcasted_iota(jnp.int32, (_LANES, _LANES), 0) >> log2c
        col = lax.broadcasted_iota(jnp.int32, (_LANES, _LANES), 1) >> log2c
        ones_blk = (r == col).astype(jnp.float32)
        denom = jnp.dot(e, ones_blk, preferred_element_type=jnp.float32)

        o_ref[...] = (e * pl.reciprocal(denom, approx=True)).astype(o_ref.dtype)

    return kernel


# ----------------------------------------------------------------------------
# Tiling / runner
# ----------------------------------------------------------------------------
def _round_up(n: int, m: int) -> int:
    return pl.cdiv(n, m) * m


def _choose_row_tile(rows: int, bytes_per_row: int) -> int:
    """Rows per grid step: multiple of 8 (or the full array), sized so the
    double-buffered I/O tiles + f32 temporaries fit the VMEM budget, and split
    into an even number of near-equal steps so v7x's two TCs share the work."""
    if rows <= _SUBLANES or rows * bytes_per_row <= _SINGLE_BLOCK_BYTES:
        return rows                                     # single untiled block
    tb_max = max(_SUBLANES,
                 (_VMEM_TILE_BUDGET_BYTES // bytes_per_row) // _SUBLANES * _SUBLANES)
    if tb_max >= rows:
        nsteps = 2                                      # balance the two v7x TCs
    else:
        nsteps = pl.cdiv(rows, tb_max)
        nsteps += nsteps % 2                            # even number of steps
    tb = _round_up(pl.cdiv(rows, nsteps), _SUBLANES)
    return min(rows, tb)


def _run_rowwise(x2d: jax.Array, kernel, *, transcendentals_per_elem: int) -> jax.Array:
    """Run `kernel` over a (rows, cols) array tiled along the row axis."""
    rows, cols = x2d.shape
    itemsize = jnp.dtype(x2d.dtype).itemsize
    cols_padded = max(_LANES, _round_up(cols, _LANES))          # lane padding
    # 2x double-buffered in + out tiles, plus ~8 f32 full-size temporaries.
    bytes_per_row = cols_padded * (4 * itemsize + 8 * 4)
    tb = _choose_row_tile(rows, bytes_per_row)
    grid = (pl.cdiv(rows, tb),)

    cost = pl.CostEstimate(
        flops=8 * rows * cols,
        transcendentals=transcendentals_per_elem * rows * cols,
        bytes_accessed=2 * rows * cols * itemsize,
    )

    return pl.pallas_call(
        kernel,
        out_shape=jax.ShapeDtypeStruct((rows, cols), x2d.dtype),
        grid_spec=pltpu.PrefetchScalarGridSpec(
            num_scalar_prefetch=0,
            grid=grid,
            in_specs=[pl.BlockSpec((tb, cols), lambda i: (i, 0))],
            out_specs=pl.BlockSpec((tb, cols), lambda i: (i, 0)),
        ),
        compiler_params=pltpu.CompilerParams(
            dimension_semantics=("parallel",),   # row tiles shard across TCs (v7x)
            vmem_limit_bytes=_VMEM_LIMIT_BYTES,
        ),
        cost_estimate=cost,
    )(x2d)


# ----------------------------------------------------------------------------
# Public entry point (== Prediction(task)(x))
# ----------------------------------------------------------------------------
def prediction(x: jax.Array, task: str) -> jax.Array:
    """Pallas equivalent of Prediction(task)(x) for (batch, num_classes) logits."""
    assert x.ndim == 2, "expected (batch, num_classes) logits"
    b, c = x.shape

    if task == "multi-label, binary-class":
        # Elementwise sigmoid, always lane-dense: flatten onto 128-wide rows
        # (cheap pad of the tail if needed), run, slice back.
        total = b * c
        total_p = _round_up(total, _LANES * _SUBLANES)   # whole vregs per row block
        flat = x.reshape(total)
        if total_p != total:
            flat = jnp.pad(flat, (0, total_p - total))
        y = _run_rowwise(flat.reshape(total_p // _LANES, _LANES), _sigmoid_kernel,
                         transcendentals_per_elem=1)
        y = y.reshape(total_p)
        if total_p != total:
            y = y[:total]
        return y.reshape(b, c)

    # Softmax over dim=1 (class axis == last axis of (B, C)).
    if c < _LANES and _LANES % c == 0:
        # Lane-dense fast path: 128//c batch rows per 128-lane vreg row.
        g = _LANES // c
        b_p = _round_up(b, g * _SUBLANES)
        xp = x if b_p == b else jnp.pad(x, ((0, b_p - b), (0, 0)))
        y = _run_rowwise(xp.reshape(b_p // g, _LANES), _make_group_softmax_kernel(c),
                         transcendentals_per_elem=2)
        y = y.reshape(b_p, c)
        return y if b_p == b else y[:b]

    # General class counts: row-wise softmax with classes on the lane axis.
    # TODO(synk): in a real model this head should be fused into the epilogue
    # of the preceding classifier GEMM to avoid the HBM round-trip of logits.
    return _run_rowwise(x, _softmax_rows_kernel, transcendentals_per_elem=2)


# ----------------------------------------------------------------------------
# Self-test
# ----------------------------------------------------------------------------
if __name__ == "__main__":
    key = jax.random.PRNGKey(0)
    k1, k2, k3, k4 = jax.random.split(key, 4)

    # Small head matching the module's (batch, num_classes) logits.
    B, C = 2, 8
    x_small = jax.random.normal(k1, (B, C), dtype=jnp.float32)

    y_sm = jax.block_until_ready(prediction(x_small, task="multi-class"))
    assert jnp.allclose(y_sm, jax.nn.softmax(x_small, axis=1),
                        atol=2e-3, rtol=2e-3), "softmax mismatch (small)"

    y_sg = jax.block_until_ready(prediction(x_small, task="multi-label, binary-class"))
    assert jnp.allclose(y_sg, jax.nn.sigmoid(x_small),
                        atol=2e-3, rtol=2e-3), "sigmoid mismatch (small)"

    # Larger ragged batch: exercises padding + the multi-step balanced grid.
    B2, C2 = 9000, 8
    x_big = jax.random.normal(k2, (B2, C2), dtype=jnp.float32) * 4.0
    y_sm_big = jax.block_until_ready(prediction(x_big, task="multi-class"))
    assert jnp.allclose(y_sm_big, jax.nn.softmax(x_big, axis=1),
                        atol=2e-3, rtol=2e-3), "softmax mismatch (lane-dense, tiled)"
    y_sg_big = jax.block_until_ready(prediction(x_big, task="multi-label, binary-class"))
    assert jnp.allclose(y_sg_big, jax.nn.sigmoid(x_big),
                        atol=2e-3, rtol=2e-3), "sigmoid mismatch (lane-dense, tiled)"

    # Class count that is not a power-of-two divisor of 128: generic row path.
    B3, C3 = 64, 100
    x_gen = jax.random.normal(k3, (B3, C3), dtype=jnp.float32)
    y_gen = jax.block_until_ready(prediction(x_gen, task="multi-class"))
    assert jnp.allclose(y_gen, jax.nn.softmax(x_gen, axis=1),
                        atol=2e-3, rtol=2e-3), "softmax mismatch (generic C)"

    # bf16 in -> bf16 out, exact lane-dense fold (no padding needed).
    B4, C4 = 2048, 8
    x_bf = jax.random.normal(k4, (B4, C4), dtype=jnp.bfloat16)
    y_bf = jax.block_until_ready(prediction(x_bf, task="multi-label, binary-class"))
    assert y_bf.dtype == jnp.bfloat16
    assert jnp.allclose(y_bf.astype(jnp.float32),
                        jax.nn.sigmoid(x_bf.astype(jnp.float32)),
                        atol=1e-2, rtol=1e-2), "sigmoid mismatch (bf16)"

    y_bf_sm = jax.block_until_ready(prediction(x_bf, task="multi-class"))
    assert jnp.allclose(y_bf_sm.astype(jnp.float32),
                        jax.nn.softmax(x_bf.astype(jnp.float32), axis=1),
                        atol=1e-2, rtol=1e-2), "softmax mismatch (bf16)"

    print("KERNEL_OK")
</pallas_src>

<mosaic_0001>
module attributes {stable_mosaic.version = 11 : i64} {
  func.func @kernel(%arg0: i32, %arg1: memref<8x128xf32, #tpu.memory_space<vmem>>, %arg2: memref<8x128xf32, #tpu.memory_space<vmem>>) attributes {dimension_semantics = [#tpu.dimension_semantics<parallel>], iteration_bounds = array<i64: 1>, scalar_prefetch = 0 : i64, scratch_operands = 0 : i64, tpu.core_type = #tpu.core_type<tc>, window_params = [{transform_indices = @transform_0, window_bounds = array<i64: 8, 128>}, {transform_indices = @transform_1, window_bounds = array<i64: 8, 128>}]} {
    %c0 = arith.constant 0 : index
    %c0_0 = arith.constant 0 : index
    %0 = vector.load %arg1[%c0, %c0_0] : memref<8x128xf32, #tpu.memory_space<vmem>>, vector<8x128xf32>
    %1 = tpu.iota {dimensions = array<i32: 1>} : vector<1x128xi32>
    %c3_i32 = arith.constant 3 : i32
    %2 = vector.broadcast %c3_i32 : i32 to vector<1x128xi32>
    %3 = arith.shrsi %1, %2 : vector<1x128xi32>
    %c1_i32 = arith.constant 1 : i32
    %4 = tpu.dynamic_rotate %0 by %c1_i32 dim 1 : vector<8x128xf32>, i32 -> vector<8x128xf32>
    %c1_i32_1 = arith.constant 1 : i32
    %5 = tpu.dynamic_rotate %3 by %c1_i32_1 dim 1 : vector<1x128xi32>, i32 -> vector<1x128xi32>
    %6 = arith.cmpi eq, %5, %3 : vector<1x128xi32>
    %cst = arith.constant 0xFF800000 : f32
    %7 = vector.shape_cast %6 : vector<1x128xi1> to vector<1x128xi1>
    %8 = vector.broadcast %7 : vector<1x128xi1> to vector<8x128xi1>
    %9 = vector.broadcast %cst : f32 to vector<8x128xf32>
    %10 = arith.select %8, %4, %9 : vector<8x128xi1>, vector<8x128xf32>
    %11 = arith.maximumf %0, %10 : vector<8x128xf32>
    %c127_i32 = arith.constant 127 : i32
    %12 = tpu.dynamic_rotate %11 by %c127_i32 dim 1 : vector<8x128xf32>, i32 -> vector<8x128xf32>
    %c127_i32_2 = arith.constant 127 : i32
    %13 = tpu.dynamic_rotate %3 by %c127_i32_2 dim 1 : vector<1x128xi32>, i32 -> vector<1x128xi32>
    %14 = arith.cmpi eq, %13, %3 : vector<1x128xi32>
    %cst_3 = arith.constant 0xFF800000 : f32
    %15 = vector.shape_cast %14 : vector<1x128xi1> to vector<1x128xi1>
    %16 = vector.broadcast %15 : vector<1x128xi1> to vector<8x128xi1>
    %17 = vector.broadcast %cst_3 : f32 to vector<8x128xf32>
    %18 = arith.select %16, %12, %17 : vector<8x128xi1>, vector<8x128xf32>
    %19 = arith.maximumf %11, %18 : vector<8x128xf32>
    %c2_i32 = arith.constant 2 : i32
    %20 = tpu.dynamic_rotate %19 by %c2_i32 dim 1 : vector<8x128xf32>, i32 -> vector<8x128xf32>
    %c2_i32_4 = arith.constant 2 : i32
    %21 = tpu.dynamic_rotate %3 by %c2_i32_4 dim 1 : vector<1x128xi32>, i32 -> vector<1x128xi32>
    %22 = arith.cmpi eq, %21, %3 : vector<1x128xi32>
    %cst_5 = arith.constant 0xFF800000 : f32
    %23 = vector.shape_cast %22 : vector<1x128xi1> to vector<1x128xi1>
    %24 = vector.broadcast %23 : vector<1x128xi1> to vector<8x128xi1>
    %25 = vector.broadcast %cst_5 : f32 to vector<8x128xf32>
    %26 = arith.select %24, %20, %25 : vector<8x128xi1>, vector<8x128xf32>
    %27 = arith.maximumf %19, %26 : vector<8x128xf32>
    %c126_i32 = arith.constant 126 : i32
    %28 = tpu.dynamic_rotate %27 by %c126_i32 dim 1 : vector<8x128xf32>, i32 -> vector<8x128xf32>
    %c126_i32_6 = arith.constant 126 : i32
    %29 = tpu.dynamic_rotate %3 by %c126_i32_6 dim 1 : vector<1x128xi32>, i32 -> vector<1x128xi32>
    %30 = arith.cmpi eq, %29, %3 : vector<1x128xi32>
    %cst_7 = arith.constant 0xFF800000 : f32
    %31 = vector.shape_cast %30 : vector<1x128xi1> to vector<1x128xi1>
    %32 = vector.broadcast %31 : vector<1x128xi1> to vector<8x128xi1>
    %33 = vector.broadcast %cst_7 : f32 to vector<8x128xf32>
    %34 = arith.select %32, %28, %33 : vector<8x128xi1>, vector<8x128xf32>
    %35 = arith.maximumf %27, %34 : vector<8x128xf32>
    %c4_i32 = arith.constant 4 : i32
    %36 = tpu.dynamic_rotate %35 by %c4_i32 dim 1 : vector<8x128xf32>, i32 -> vector<8x128xf32>
    %c4_i32_8 = arith.constant 4 : i32
    %37 = tpu.dynamic_rotate %3 by %c4_i32_8 dim 1 : vector<1x128xi32>, i32 -> vector<1x128xi32>
    %38 = arith.cmpi eq, %37, %3 : vector<1x128xi32>
    %cst_9 = arith.constant 0xFF800000 : f32
    %39 = vector.shape_cast %38 : vector<1x128xi1> to vector<1x128xi1>
    %40 = vector.broadcast %39 : vector<1x128xi1> to vector<8x128xi1>
    %41 = vector.broadcast %cst_9 : f32 to vector<8x128xf32>
    %42 = arith.select %40, %36, %41 : vector<8x128xi1>, vector<8x128xf32>
    %43 = arith.maximumf %35, %42 : vector<8x128xf32>
    %c124_i32 = arith.constant 124 : i32
    %44 = tpu.dynamic_rotate %43 by %c124_i32 dim 1 : vector<8x128xf32>, i32 -> vector<8x128xf32>
    %c124_i32_10 = arith.constant 124 : i32
    %45 = tpu.dynamic_rotate %3 by %c124_i32_10 dim 1 : vector<1x128xi32>, i32 -> vector<1x128xi32>
    %46 = arith.cmpi eq, %45, %3 : vector<1x128xi32>
    %cst_11 = arith.constant 0xFF800000 : f32
    %47 = vector.shape_cast %46 : vector<1x128xi1> to vector<1x128xi1>
    %48 = vector.broadcast %47 : vector<1x128xi1> to vector<8x128xi1>
    %49 = vector.broadcast %cst_11 : f32 to vector<8x128xf32>
    %50 = arith.select %48, %44, %49 : vector<8x128xi1>, vector<8x128xf32>
    %51 = arith.maximumf %43, %50 : vector<8x128xf32>
    %52 = arith.subf %0, %51 : vector<8x128xf32>
    %53 = math.exp %52 : vector<8x128xf32>
    %54 = tpu.iota {dimensions = array<i32: 0>} : vector<128x128xi32>
    %c3_i32_12 = arith.constant 3 : i32
    %55 = vector.broadcast %c3_i32_12 : i32 to vector<128x128xi32>
    %56 = arith.shrsi %54, %55 : vector<128x128xi32>
    %57 = tpu.iota {dimensions = array<i32: 1>} : vector<128x128xi32>
    %c3_i32_13 = arith.constant 3 : i32
    %58 = vector.broadcast %c3_i32_13 : i32 to vector<128x128xi32>
    %59 = arith.shrsi %57, %58 : vector<128x128xi32>
    %60 = arith.cmpi eq, %56, %59 : vector<128x128xi32>
    %61 = arith.extui %60 : vector<128x128xi1> to vector<128x128xi32>
    %62 = arith.sitofp %61 : vector<128x128xi32> to vector<128x128xf32>
    %cst_14 = arith.constant dense<0.000000e+00> : vector<8x128xf32>
    %63 = tpu.matmul %53, %62, %cst_14 {dimension_numbers = #tpu.dot_dimension_numbers<[1], [0], [0], [1], [0, 0, 1, 1], [], []>} : vector<8x128xf32>, vector<128x128xf32>, vector<8x128xf32> -> vector<8x128xf32>
    %64 = tpu.reciprocal %63 {approx = true} : vector<8x128xf32> -> vector<8x128xf32>
    %65 = arith.mulf %53, %64 : vector<8x128xf32>
    %c0_15 = arith.constant 0 : index
    %c0_16 = arith.constant 0 : index
    %66 = vector.load %arg2[%c0_15, %c0_16] : memref<8x128xf32, #tpu.memory_space<vmem>>, vector<8x128xf32>
    tpu.vector_store %arg2[%c0_15, %c0_16], %65 {strides = array<i32>} : memref<8x128xf32, #tpu.memory_space<vmem>>, vector<8x128xf32>,
    return
  }
  func.func @transform_0(%arg0: i32) -> (i32, i32) {
    %c0_i32 = arith.constant 0 : i32
    %c0_i32_0 = arith.constant 0 : i32
    return %arg0, %c0_i32 : i32, i32
  }
  func.func @transform_1(%arg0: i32) -> (i32, i32) {
    %c0_i32 = arith.constant 0 : i32
    %c0_i32_0 = arith.constant 0 : i32
    return %arg0, %c0_i32 : i32, i32
  }
}

</mosaic_0001>

<llo_original>
// kernel: tpu_custom_call.1
$region0: #{tpu_custom_call.1}
  #allocation0 [shape = 'u32[]', space=smem, size = 0x4, offset = 0x4, fixed_abs, tag = 'smem constant byte address 0x4 - core index']
  #allocation1 [shape = 'u32[144,128]{1,0:T(1,128)}', space=vmem, size = 0x12000, scoped, tag = 'internal scratch']
  %s0 = inlined_call_operand.hbm [shape: f32[8,128], index: 0, kind: input, shape index: {}]
  %s1 = inlined_call_operand.hbm [shape: f32[8,128], index: 1, kind: output, shape index: {}]
  %s2 = sld [smem:[#allocation0]]
  $region18: #{tpu_custom_call.1} parent=0
    _
  %s4 = ssub.s32 1, %s2
  %s5 = scalar_select 0, %s4, %s2
  $region1: #{tpu_custom_call.1} parent=0
    #allocation2 [shape = 'u8[4096]{0}', space=vmem, size = 0x1000, scoped, tag = 'input window, operand 0, single buffered']
    #allocation3 [shape = 's32[1]{0}', space=sflag, size = 0x4, scoped, tag = 'scoped memory for tpu_custom_call.1']
    #allocation4 [shape = 's32[1]{0}', space=sflag, size = 0x4, scoped, tag = 'scoped memory for tpu_custom_call.1']
    #allocation5 [shape = 'u8[4096]{0}', space=vmem, size = 0x1000, scoped, tag = 'output window, operand 0, single buffered']
    %6 = vsyncpa [#allocation3], 0
    %7 = vsyncpa [#allocation4], 0
    // Predicated region
    $region2: #{tpu_custom_call.1} parent=1 // pred_check
      _
    $region3: #{tpu_custom_call.1} parent=1 // pred_check_branch
      %9 = sbr.rel (0) target = $region5
    $region4: #{tpu_custom_call.1} parent=1 // pred_region
      %s11 = ssub.s32 128, 128
      %12 = vsyncadd [#allocation3], %s11
      %s14 = sshll.u32 [#allocation2], 4
      %s15 = int_to_ptr.vmem [resolvable:$true] %s14
      %17 = dma.hbm_to_vmem [thread:$0]  %s0, 128, %s15, [#allocation3]
    $region5: #{tpu_custom_call.1} parent=1 // pred_fallthru
      _
    // Predicated region
    $region6: #{tpu_custom_call.1} parent=1 // pred_check
      _
    $region7: #{tpu_custom_call.1} parent=1 // pred_check_branch
      %19 = sbr.rel (0) target = $region9
    $region8: #{tpu_custom_call.1} parent=1 // pred_region
      %20 = dma.done [#allocation3], 128
    $region9: #{tpu_custom_call.1} parent=1 // pred_fallthru
      _
    %v21 = vld [vmem:[#allocation2] sm:$0xff]
    %v22 = vlaneseq
    %v23 = vand.u32 %v22, 127
    %v24 = vshra.s32 %v23, 3
    %25 = vrot.lane.b32.xlu0 %v21, 1
    %v26 = vpop.permute.xlu0 %25
    %27 = vrot.lane.b32.xlu0 %v24, 1
    %v28 = vpop.permute.xlu0 %27
    %vm29 = vcmp.eq.s32.totalorder %v28, %v24
    %v30 = vsel %vm29, 1, 0
    %v31 = vlaneseq
    %v32 = vshrl.u32 %v31, 7
    %v33 = vsub.s32 0, %v32
    %v34 = vrot.slane %v30, %v33
    %vm35 = vcmp.eq.s32.totalorder %v34, 1
    %v36 = vsel %vm35, %v26, -inf
    %v37 = vmax.f32 %v21, %v36
    %38 = vrot.lane.b32.xlu0 %v37, 127
    %v39 = vpop.permute.xlu0 %38
    %40 = vrot.lane.b32.xlu0 %v24, 127
    %v41 = vpop.permute.xlu0 %40
    %vm42 = vcmp.eq.s32.totalorder %v41, %v24
    %v43 = vsel %vm42, 1, 0
    %v44 = vlaneseq
    %v45 = vshrl.u32 %v44, 7
    %v46 = vsub.s32 0, %v45
    %v47 = vrot.slane %v43, %v46
    %vm48 = vcmp.eq.s32.totalorder %v47, 1
    %v49 = vsel %vm48, %v39, -inf
    %v50 = vmax.f32 %v37, %v49
    %51 = vrot.lane.b32.xlu0 %v50, 2
    %v52 = vpop.permute.xlu0 %51
    %53 = vrot.lane.b32.xlu0 %v24, 2
    %v54 = vpop.permute.xlu0 %53
    %vm55 = vcmp.eq.s32.totalorder %v54, %v24
    %v56 = vsel %vm55, 1, 0
    %v57 = vlaneseq
    %v58 = vshrl.u32 %v57, 7
    %v59 = vsub.s32 0, %v58
    %v60 = vrot.slane %v56, %v59
    %vm61 = vcmp.eq.s32.totalorder %v60, 1
    %v62 = vsel %vm61, %v52, -inf
    %v63 = vmax.f32 %v50, %v62
    %64 = vrot.lane.b32.xlu0 %v63, 126
    %v65 = vpop.permute.xlu0 %64
    %66 = vrot.lane.b32.xlu0 %v24, 126
    %v67 = vpop.permute.xlu0 %66
    %vm68 = vcmp.eq.s32.totalorder %v67, %v24
    %v69 = vsel %vm68, 1, 0
    %v70 = vlaneseq
    %v71 = vshrl.u32 %v70, 7
    %v72 = vsub.s32 0, %v71
    %v73 = vrot.slane %v69, %v72
    %vm74 = vcmp.eq.s32.totalorder %v73, 1
    %v75 = vsel %vm74, %v65, -inf
    %v76 = vmax.f32 %v63, %v75
    %77 = vrot.lane.b32.xlu0 %v76, 4
    %v78 = vpop.permute.xlu0 %77
    %79 = vrot.lane.b32.xlu0 %v24, 4
    %v80 = vpop.permute.xlu0 %79
    %vm81 = vcmp.eq.s32.totalorder %v80, %v24
    %v82 = vsel %vm81, 1, 0
    %v83 = vlaneseq
    %v84 = vshrl.u32 %v83, 7
    %v85 = vsub.s32 0, %v84
    %v86 = vrot.slane %v82, %v85
    %vm87 = vcmp.eq.s32.totalorder %v86, 1
    %v88 = vsel %vm87, %v78, -inf
    %v89 = vmax.f32 %v76, %v88
    %90 = vrot.lane.b32.xlu0 %v89, 124
    %v91 = vpop.permute.xlu0 %90
    %92 = vrot.lane.b32.xlu0 %v24, 124
    %v93 = vpop.permute.xlu0 %92
    %vm94 = vcmp.eq.s32.totalorder %v93, %v24
    %v95 = vsel %vm94, 1, 0
    %v96 = vlaneseq
    %v97 = vshrl.u32 %v96, 7
    %v98 = vsub.s32 0, %v97
    %v99 = vrot.slane %v95, %v98
    %vm100 = vcmp.eq.s32.totalorder %v99, 1
    %v101 = vsel %vm100, %v91, -inf
    %v102 = vmax.f32 %v89, %v101
    %v103 = vsub.f32 %v21, %v102
    %v104 = vmul.f32 %v103, 1.442695
    %v105 = vpow.pop %v104
    %v106 = vlaneseq
    %v107 = vshrl.u32 %v106, 7
    %v108 = vadd.s32 %v107, 8
    %v109 = vadd.s32 %v107, 16
    %v110 = vadd.s32 %v107, 24
    %v111 = vadd.s32 %v107, 32
    %v112 = vadd.s32 %v107, 40
    %v113 = vadd.s32 %v107, 48
    %v114 = vadd.s32 %v107, 56
    %v115 = vadd.s32 %v107, 64
    %v116 = vadd.s32 %v107, 72
    %v117 = vadd.s32 %v107, 80
    %v118 = vadd.s32 %v107, 88
    %v119 = vadd.s32 %v107, 96
    %v120 = vadd.s32 %v107, 104
    %v121 = vadd.s32 %v107, 112
    %v122 = vadd.s32 %v107, 120
    %v123 = vshra.s32 %v107, 3
    %v124 = vshra.s32 %v108, 3
    %v125 = vshra.s32 %v109, 3
    %v126 = vshra.s32 %v110, 3
    %v127 = vshra.s32 %v111, 3
    %v128 = vshra.s32 %v112, 3
    %v129 = vshra.s32 %v113, 3
    %v130 = vshra.s32 %v114, 3
    %v131 = vshra.s32 %v115, 3
    %v132 = vshra.s32 %v116, 3
    %v133 = vshra.s32 %v117, 3
    %v134 = vshra.s32 %v118, 3
    %v135 = vshra.s32 %v119, 3
    %v136 = vshra.s32 %v120, 3
    %v137 = vshra.s32 %v121, 3
    %v138 = vshra.s32 %v122, 3
    %vm139 = vcmp.eq.s32.totalorder %v123, %v24
    %vm140 = vcmp.eq.s32.totalorder %v124, %v24
    %vm141 = vcmp.eq.s32.totalorder %v125, %v24
    %vm142 = vcmp.eq.s32.totalorder %v126, %v24
    %vm143 = vcmp.eq.s32.totalorder %v127, %v24
    %vm144 = vcmp.eq.s32.totalorder %v128, %v24
    %vm145 = vcmp.eq.s32.totalorder %v129, %v24
    %vm146 = vcmp.eq.s32.totalorder %v130, %v24
    %vm147 = vcmp.eq.s32.totalorder %v131, %v24
    %vm148 = vcmp.eq.s32.totalorder %v132, %v24
    %vm149 = vcmp.eq.s32.totalorder %v133, %v24
    %vm150 = vcmp.eq.s32.totalorder %v134, %v24
    %vm151 = vcmp.eq.s32.totalorder %v135, %v24
    %vm152 = vcmp.eq.s32.totalorder %v136, %v24
    %vm153 = vcmp.eq.s32.totalorder %v137, %v24
    %vm154 = vcmp.eq.s32.totalorder %v138, %v24
    %v155 = vsel %vm139, 1, 0
    %v156 = vsel %vm140, 1, 0
    %v157 = vsel %vm141, 1, 0
    %v158 = vsel %vm142, 1, 0
    %v159 = vsel %vm143, 1, 0
    %v160 = vsel %vm144, 1, 0
    %v161 = vsel %vm145, 1, 0
    %v162 = vsel %vm146, 1, 0
    %v163 = vsel %vm147, 1, 0
    %v164 = vsel %vm148, 1, 0
    %v165 = vsel %vm149, 1, 0
    %v166 = vsel %vm150, 1, 0
    %v167 = vsel %vm151, 1, 0
    %v168 = vsel %vm152, 1, 0
    %v169 = vsel %vm153, 1, 0
    %v170 = vsel %vm154, 1, 0
    %v171 = vcvt.s32.f32 %v155
    %v172 = vcvt.s32.f32 %v156
    %v173 = vcvt.s32.f32 %v157
    %v174 = vcvt.s32.f32 %v158
    %v175 = vcvt.s32.f32 %v159
    %v176 = vcvt.s32.f32 %v160
    %v177 = vcvt.s32.f32 %v161
    %v178 = vcvt.s32.f32 %v162
    %v179 = vcvt.s32.f32 %v163
    %v180 = vcvt.s32.f32 %v164
    %v181 = vcvt.s32.f32 %v165
    %v182 = vcvt.s32.f32 %v166
    %v183 = vcvt.s32.f32 %v167
    %v184 = vcvt.s32.f32 %v168
    %v185 = vcvt.s32.f32 %v169
    %v186 = vcvt.s32.f32 %v170
    %187 = vmatprep.subr.mxu0 0.0
    %188 = vmatpush1.msra.mxu0 %v171
    %189 = vmatprep.subr.mxu0 0.0
    %190 = vmatpush1.msra.mxu0 %v172
    %191 = vmatprep.subr.mxu0 0.0
    %192 = vmatpush1.msra.mxu0 %v173
    %193 = vmatprep.subr.mxu0 0.0
    %194 = vmatpush1.msra.mxu0 %v174
    %195 = vmatprep.subr.mxu0 0.0
    %196 = vmatpush1.msra.mxu0 %v175
    %197 = vmatprep.subr.mxu0 0.0
    %198 = vmatpush1.msra.mxu0 %v176
    %199 = vmatprep.subr.mxu0 0.0
    %200 = vmatpush1.msra.mxu0 %v177
    %201 = vmatprep.subr.mxu0 0.0
    %202 = vmatpush1.msra.mxu0 %v178
    %203 = vmatprep.subr.mxu0 0.0
    %204 = vmatpush1.msra.mxu0 %v179
    %205 = vmatprep.subr.mxu0 0.0
    %206 = vmatpush1.msra.mxu0 %v180
    %207 = vmatprep.subr.mxu0 0.0
    %208 = vmatpush1.msra.mxu0 %v181
    %209 = vmatprep.subr.mxu0 0.0
    %210 = vmatpush1.msra.mxu0 %v182
    %211 = vmatprep.subr.mxu0 0.0
    %212 = vmatpush1.msra.mxu0 %v183
    %213 = vmatprep.subr.mxu0 0.0
    %214 = vmatpush1.msra.mxu0 %v184
    %215 = vmatprep.subr.mxu0 0.0
    %216 = vmatpush1.msra.mxu0 %v185
    %217 = vmatprep.subr.mxu0 0.0
    %218 = vmatpush1.msra.mxu0 %v186
    %219 = vmatprep.subr.mxu0 0.0
    %220 = vmatpush1.msra.mxu0 0.0
    %221 = vmatprep.subr.mxu0 0.0
    %222 = vmatpush1.msra.mxu0 0.0
    %223 = vmatprep.subr.mxu0 0.0
    %224 = vmatpush1.msra.mxu0 0.0
    %225 = vmatprep.subr.mxu0 0.0
    %226 = vmatpush1.msra.mxu0 0.0
    %227 = vmatprep.subr.mxu0 0.0
    %228 = vmatpush1.msra.mxu0 0.0
    %229 = vmatprep.subr.mxu0 0.0
    %230 = vmatpush1.msra.mxu0 0.0
    %231 = vmatprep.subr.mxu0 0.0
    %232 = vmatpush1.msra.mxu0 0.0
    %233 = vmatprep.subr.mxu0 0.0
    %234 = vmatpush1.msra.mxu0 0.0
    %235 = vmatprep.subr.mxu0 0.0
    %236 = vmatpush1.msra.mxu0 0.0
    %237 = vmatprep.subr.mxu0 0.0
    %238 = vmatpush1.msra.mxu0 0.0
    %239 = vmatprep.subr.mxu0 0.0
    %240 = vmatpush1.msra.mxu0 0.0
    %241 = vmatprep.subr.mxu0 0.0
    %242 = vmatpush1.msra.mxu0 0.0
    %243 = vmatprep.subr.mxu0 0.0
    %244 = vmatpush1.msra.mxu0 0.0
    %245 = vmatprep.subr.mxu0 0.0
    %246 = vmatpush1.msra.mxu0 0.0
    %247 = vmatprep.subr.mxu0 0.0
    %248 = vmatpush1.msra.mxu0 0.0
    %249 = vmatprep.subr.mxu0 0.0
    %250 = vmatpush1.msra.mxu0 0.0
    %251 = vmatprep.mubr.f32.mxu0 0.0
    %252 = vmatmul.mubr.f32.gmra.mrb[0].mxu0 %v105
    %v253 = vpop.f32.mrb[0].mxu0
    %v254 = vadd.f32 0.0, %v253
    %v255 = vpop.f32.mrb[0].mxu0
    %256 = vdwg.mxu0
    %v257 = vrcp.pop %v254
    %v258 = vmul.f32 %v105, %v257
    %259 = vst [vmem:[#allocation5] sm:$0xff] %v258
    // Predicated region
    $region10: #{tpu_custom_call.1} parent=1 // pred_check
      _
    $region11: #{tpu_custom_call.1} parent=1 // pred_check_branch
      %261 = sbr.rel (0) target = $region13
    $region12: #{tpu_custom_call.1} parent=1 // pred_region
      %s263 = ssub.s32 128, 128
      %264 = vsyncadd [#allocation4], %s263
      %s266 = sshll.u32 [#allocation5], 4
      %s267 = int_to_ptr.vmem [resolvable:$true] %s266
      %269 = dma.vmem_to_hbm [thread:$0]  %s267, 128, %s1, [#allocation4]
    $region13: #{tpu_custom_call.1} parent=1 // pred_fallthru
      _
    // Predicated region
    $region14: #{tpu_custom_call.1} parent=1 // pred_check
      _
    $region15: #{tpu_custom_call.1} parent=1 // pred_check_branch
      %271 = sbr.rel (0) target = $region17
    $region16: #{tpu_custom_call.1} parent=1 // pred_region
      %272 = dma.done [#allocation4], 128
    $region17: #{tpu_custom_call.1} parent=1 // pred_fallthru
      _
    %273 = vsyncpa [#allocation3], 1
    %274 = vsyncpa [#allocation4], 1

</llo_original>
